<compile_context>
chip_gen: v7x
topology: tpu7x:2x2x1
jax: 0.10.0
libtpu: 0.0.40
codegen_flags: <defaults>
</compile_context>

<pallas_src>
import functools

import jax
import jax.numpy as jnp
from jax.experimental import pallas as pl
from jax.experimental.pallas import tpu as pltpu

LN_EPS = 1e-12


def _round_up(x, m):
    return ((x + m - 1) // m) * m


def _shrink_tile(t):
    """Halve a row tile, keeping it a multiple of 8 and >= 8."""
    return max(8, _round_up(t // 2, 8))


def _vmem_budget_bytes():
    """Generation-aware VMEM budget (leave ~20% headroom for compiler scratch)."""
    try:
        cap = int(pltpu.get_tpu_info().vmem_capacity_bytes)
    except Exception:
        cap = 64 * 1024 * 1024  # conservative default == v7x per-TensorCore VMEM
    return max(16 * 1024 * 1024, int(cap * 0.8))


def _layernorm_f32(y, gamma, beta, n_true, n_pad):
    """LayerNorm over the true hidden width. Padded lanes of `y` must be exactly 0."""
    inv_n = jnp.float32(1.0 / n_true)
    mean = jnp.sum(y, axis=-1, keepdims=True) * inv_n
    centered = y - mean
    if n_pad != n_true:
        lane = jax.lax.broadcasted_iota(jnp.int32, y.shape, y.ndim - 1)
        centered = jnp.where(lane < n_true, centered, 0.0)
    var = jnp.sum(centered * centered, axis=-1, keepdims=True) * inv_n
    normed = centered * jax.lax.rsqrt(var + LN_EPS)  # EUP rsqrt (free slot)
    return normed * gamma.astype(jnp.float32) + beta.astype(jnp.float32)


def _resident_kernel(h_ref, w_ref, b_ref, res_ref, g_ref, beta_ref, o_ref,
                     *, n_true, n_pad):
    # h_ref:    (tm, Ip)  activation rows (native dtype -> bf16 MXU fast path if bf16)
    # w_ref:    (Ip, Np)  full dense weight; constant index_map -> fetched once
    # b_ref:    (1, Np)   dense bias
    # res_ref:  (tm, Np)  residual rows (input_tensor)
    # g_/beta_ref: (1, Np) LayerNorm gamma / beta
    # o_ref:    (tm, Np)  output rows
    y = jnp.dot(h_ref[...], w_ref[...], preferred_element_type=jnp.float32)
    y = y + b_ref[...].astype(jnp.float32) + res_ref[...].astype(jnp.float32)
    # TODO(synk): dropout is identity in eval mode; training parity would need a
    # pltpu.prng_seed / prng_random_bits mask applied to the dense output here.
    o_ref[...] = _layernorm_f32(y, g_ref[...], beta_ref[...],
                                n_true, n_pad).astype(o_ref.dtype)


def _streaming_kernel(h_ref, w_ref, b_ref, res_ref, g_ref, beta_ref, o_ref, acc_ref,
                      *, n_true, n_pad):
    # Fallback when the weight does not fit resident in VMEM: stream (tk, Np) weight
    # slabs along the last ("arbitrary") grid axis into an f32 accumulator.
    k = pl.program_id(1)

    @pl.when(k == 0)
    def _():
        # Initialize with bias + residual so the last-K epilogue is LayerNorm only.
        acc_ref[...] = (b_ref[...].astype(jnp.float32)
                        + res_ref[...].astype(jnp.float32))

    acc_ref[...] += jnp.dot(h_ref[...], w_ref[...],
                            preferred_element_type=jnp.float32)

    @pl.when(k == pl.num_programs(1) - 1)
    def _():
        # TODO(synk): dropout is identity in eval mode (see resident kernel).
        o_ref[...] = _layernorm_f32(acc_ref[...], g_ref[...], beta_ref[...],
                                    n_true, n_pad).astype(o_ref.dtype)


def bert_output(hidden_states, input_tensor, weight, bias, gamma, beta,
                *, tm=None, tk=512, matmul_dtype=None):
    """Fused BertOutput forward (eval-mode dropout).

    hidden_states: (B, S, I); input_tensor: (B, S, N); weight: (I, N) (= torch W.T);
    bias/gamma/beta: (N,).  Pass bf16 activations/weights (or matmul_dtype=jnp.bfloat16)
    for the bf16 MXU path on v5e/v6e/v7x; accumulation and LayerNorm remain f32.
    """
    B, S, I = hidden_states.shape
    N = weight.shape[1]
    assert weight.shape[0] == I
    assert input_tensor.shape == (B, S, N)
    M = B * S

    if matmul_dtype is not None:
        hidden_states = hidden_states.astype(matmul_dtype)
        weight = weight.astype(matmul_dtype)

    out_dtype = input_tensor.dtype
    act_bytes = jnp.dtype(hidden_states.dtype).itemsize
    w_bytes = jnp.dtype(weight.dtype).itemsize
    res_bytes = jnp.dtype(input_tensor.dtype).itemsize
    out_bytes = jnp.dtype(out_dtype).itemsize

    n_pad = _round_up(N, 128)
    budget = _vmem_budget_bytes()

    # ---- resident vs streaming decision -------------------------------------------
    i_pad_res = _round_up(I, 128)
    # Conservative: assume the constant-index weight block still gets 2 pipeline buffers.
    weight_resident_bytes = 2 * i_pad_res * n_pad * w_bytes
    use_resident = weight_resident_bytes <= int(0.6 * budget)

    # ---- row-tile selection ----------------------------------------------------------
    if tm is None:
        tm = 512 if act_bytes < 4 else 256  # bf16 -> bigger tiles, f32 -> 256
    tm = max(8, min(_round_up(tm, 8), _round_up(M, 8)))

    def _m_tiles(t):
        return _round_up(M, t) // t

    # v7x megacore: keep >= 2 row tiles so the "parallel" M axis shards across both TCs.
    while tm > 8 and _m_tiles(tm) < 2:
        tm = _shrink_tile(tm)

    # Streaming K-slab size (only used on the fallback path).
    tk_eff = max(128, min(_round_up(tk, 128), _round_up(I, 128)))

    if use_resident:
        def _resident_vmem(t):
            return (2 * t * i_pad_res * act_bytes       # activation rows (double-buf)
                    + weight_resident_bytes             # resident weight
                    + 2 * t * n_pad * res_bytes         # residual rows (double-buf)
                    + 2 * t * n_pad * out_bytes         # output rows (double-buf)
                    + 6 * n_pad * 4)                    # bias / gamma / beta
        while tm > 8 and _resident_vmem(tm) > budget:
            tm = _shrink_tile(tm)
        use_resident = _resident_vmem(tm) <= budget

    if not use_resident:
        def _streaming_vmem(t):
            return (2 * (t * tk_eff * act_bytes + tk_eff * n_pad * w_bytes
                         + t * n_pad * res_bytes + t * n_pad * out_bytes)
                    + t * n_pad * 4 + 6 * n_pad * 4)
        while tm > 8 and _streaming_vmem(tm) > budget:
            tm = _shrink_tile(tm)

    m_pad = _round_up(M, tm)
    grid_m = m_pad // tm

    # ---- host-side padding (no-ops when BERT dims are already aligned) ---------------
    def _pad2(x, rows, cols):
        r, c = x.shape
        if r == rows and c == cols:
            return x
        return jnp.pad(x, ((0, rows - r), (0, cols - c)))

    def _pad_vec(v):
        if N != n_pad:
            v = jnp.pad(v, (0, n_pad - N))
        return v.reshape(1, n_pad)

    r2 = _pad2(input_tensor.reshape(M, N), m_pad, n_pad)
    b2 = _pad_vec(bias)
    g2 = _pad_vec(gamma)
    be2 = _pad_vec(beta)

    kernel_kwargs = dict(n_true=N, n_pad=n_pad)

    if use_resident:
        i_pad = i_pad_res
        h2 = _pad2(hidden_states.reshape(M, I), m_pad, i_pad)
        w2 = _pad2(weight, i_pad, n_pad)

        grid = (grid_m,)
        in_specs = [
            pl.BlockSpec((tm, i_pad), lambda i: (i, 0)),      # activation rows
            pl.BlockSpec((i_pad, n_pad), lambda i: (0, 0)),   # full weight (resident)
            pl.BlockSpec((1, n_pad), lambda i: (0, 0)),       # dense bias
            pl.BlockSpec((tm, n_pad), lambda i: (i, 0)),      # residual rows
            pl.BlockSpec((1, n_pad), lambda i: (0, 0)),       # LN gamma
            pl.BlockSpec((1, n_pad), lambda i: (0, 0)),       # LN beta
        ]
        out_specs = pl.BlockSpec((tm, n_pad), lambda i: (i, 0))
        scratch_shapes = []
        kernel = functools.partial(_resident_kernel, **kernel_kwargs)
        dim_sem = ("parallel",)
        weight_reads = 1
    else:
        i_pad = _round_up(I, tk_eff)
        h2 = _pad2(hidden_states.reshape(M, I), m_pad, i_pad)
        w2 = _pad2(weight, i_pad, n_pad)

        grid = (grid_m, i_pad // tk_eff)
        in_specs = [
            pl.BlockSpec((tm, tk_eff), lambda i, k: (i, k)),     # activation K slab
            pl.BlockSpec((tk_eff, n_pad), lambda i, k: (k, 0)),  # weight K slab
            pl.BlockSpec((1, n_pad), lambda i, k: (0, 0)),       # dense bias
            pl.BlockSpec((tm, n_pad), lambda i, k: (i, 0)),      # residual rows
            pl.BlockSpec((1, n_pad), lambda i, k: (0, 0)),       # LN gamma
            pl.BlockSpec((1, n_pad), lambda i, k: (0, 0)),       # LN beta
        ]
        out_specs = pl.BlockSpec((tm, n_pad), lambda i, k: (i, 0))
        scratch_shapes = [pltpu.VMEM((tm, n_pad), jnp.float32)]
        kernel = functools.partial(_streaming_kernel, **kernel_kwargs)
        dim_sem = ("parallel", "arbitrary")
        weight_reads = grid_m  # weight slabs are re-fetched once per M row tile

    cost = pl.CostEstimate(
        flops=2 * m_pad * i_pad * n_pad,
        transcendentals=m_pad,  # one rsqrt per row
        bytes_accessed=(m_pad * i_pad * act_bytes
                        + weight_reads * i_pad * n_pad * w_bytes
                        + m_pad * n_pad * res_bytes
                        + m_pad * n_pad * out_bytes),
    )

    out = pl.pallas_call(
        kernel,
        out_shape=jax.ShapeDtypeStruct((m_pad, n_pad), out_dtype),
        grid_spec=pltpu.PrefetchScalarGridSpec(
            num_scalar_prefetch=0,
            grid=grid,
            in_specs=in_specs,
            out_specs=out_specs,
            scratch_shapes=scratch_shapes,
        ),
        compiler_params=pltpu.CompilerParams(
            dimension_semantics=dim_sem,
            vmem_limit_bytes=budget,
        ),
        cost_estimate=cost,
    )(h2, w2, b2, r2, g2, be2)

    if m_pad != M or n_pad != N:
        out = out[:M, :N]
    return out.reshape(B, S, N)


def reference(hidden_states, input_tensor, weight, bias, gamma, beta):
    y = jnp.einsum("bsi,in->bsn", hidden_states, weight) + bias
    y = y + input_tensor
    mean = jnp.mean(y, axis=-1, keepdims=True)
    var = jnp.mean((y - mean) ** 2, axis=-1, keepdims=True)
    return (y - mean) * jax.lax.rsqrt(var + LN_EPS) * gamma + beta


if __name__ == "__main__":
    # Small BERT-like config: intermediate_size=64, hidden_size=32
    B, S, I, N = 2, 8, 64, 32

    key = jax.random.PRNGKey(0)
    k1, k2, k3, k4 = jax.random.split(key, 4)

    hidden_states = jax.random.normal(k1, (B, S, I), dtype=jnp.float32)
    input_tensor = jax.random.normal(k2, (B, S, N), dtype=jnp.float32)

    # Deterministic synthetic parameters (torch Linear weight is (N, I); we pass W.T).
    weight = jax.random.normal(k3, (I, N), dtype=jnp.float32) * (1.0 / jnp.sqrt(I))
    bias = jax.random.normal(k4, (N,), dtype=jnp.float32) * 0.02
    gamma = jnp.ones((N,), dtype=jnp.float32)
    beta = jnp.zeros((N,), dtype=jnp.float32)

    out = bert_output(hidden_states, input_tensor, weight, bias, gamma, beta)
    out = jax.block_until_ready(out)

    ref = reference(hidden_states, input_tensor, weight, bias, gamma, beta)
    assert out.shape == (B, S, N)
    assert jnp.allclose(out, ref, atol=1e-4, rtol=1e-4), "mismatch vs reference"

    print("KERNEL_OK")
</pallas_src>

<mosaic_0001>
module attributes {stable_mosaic.version = 11 : i64} {
  func.func @_resident_kernel(%arg0: i32, %arg1: memref<8x128xf32, #tpu.memory_space<vmem>>, %arg2: memref<128x128xf32, #tpu.memory_space<vmem>>, %arg3: memref<1x128xf32, #tpu.memory_space<vmem>>, %arg4: memref<8x128xf32, #tpu.memory_space<vmem>>, %arg5: memref<1x128xf32, #tpu.memory_space<vmem>>, %arg6: memref<1x128xf32, #tpu.memory_space<vmem>>, %arg7: memref<8x128xf32, #tpu.memory_space<vmem>>) attributes {dimension_semantics = [#tpu.dimension_semantics<parallel>], iteration_bounds = array<i64: 2>, scalar_prefetch = 0 : i64, scratch_operands = 0 : i64, tpu.core_type = #tpu.core_type<tc>, window_params = [{transform_indices = @transform_0, window_bounds = array<i64: 8, 128>}, {pipeline_mode = #tpu.pipeline_mode<synchronous>, transform_indices = @transform_1, window_bounds = array<i64: 128, 128>}, {pipeline_mode = #tpu.pipeline_mode<synchronous>, transform_indices = @transform_2, window_bounds = array<i64: 1, 128>}, {transform_indices = @transform_3, window_bounds = array<i64: 8, 128>}, {pipeline_mode = #tpu.pipeline_mode<synchronous>, transform_indices = @transform_4, window_bounds = array<i64: 1, 128>}, {pipeline_mode = #tpu.pipeline_mode<synchronous>, transform_indices = @transform_5, window_bounds = array<i64: 1, 128>}, {transform_indices = @transform_6, window_bounds = array<i64: 8, 128>}]} {
    %c0 = arith.constant 0 : index
    %c0_0 = arith.constant 0 : index
    %0 = vector.load %arg1[%c0, %c0_0] : memref<8x128xf32, #tpu.memory_space<vmem>>, vector<8x128xf32>
    %c0_1 = arith.constant 0 : index
    %c0_2 = arith.constant 0 : index
    %1 = vector.load %arg2[%c0_1, %c0_2] : memref<128x128xf32, #tpu.memory_space<vmem>>, vector<128x128xf32>
    %cst = arith.constant dense<0.000000e+00> : vector<8x128xf32>
    %2 = tpu.matmul %0, %1, %cst {dimension_numbers = #tpu.dot_dimension_numbers<[1], [0], [0], [1], [0, 0, 1, 1], [], []>} : vector<8x128xf32>, vector<128x128xf32>, vector<8x128xf32> -> vector<8x128xf32>
    %c0_3 = arith.constant 0 : index
    %c0_4 = arith.constant 0 : index
    %3 = vector.load %arg3[%c0_3, %c0_4] : memref<1x128xf32, #tpu.memory_space<vmem>>, vector<1x128xf32>
    %4 = vector.broadcast %3 : vector<1x128xf32> to vector<8x128xf32>
    %5 = arith.addf %2, %4 : vector<8x128xf32>
    %c0_5 = arith.constant 0 : index
    %c0_6 = arith.constant 0 : index
    %6 = vector.load %arg4[%c0_5, %c0_6] : memref<8x128xf32, #tpu.memory_space<vmem>>, vector<8x128xf32>
    %7 = arith.addf %5, %6 : vector<8x128xf32>
    %c0_7 = arith.constant 0 : index
    %c0_8 = arith.constant 0 : index
    %8 = vector.load %arg5[%c0_7, %c0_8] : memref<1x128xf32, #tpu.memory_space<vmem>>, vector<1x128xf32>
    %c0_9 = arith.constant 0 : index
    %c0_10 = arith.constant 0 : index
    %9 = vector.load %arg6[%c0_9, %c0_10] : memref<1x128xf32, #tpu.memory_space<vmem>>, vector<1x128xf32>
    %cst_11 = arith.constant dense<0.000000e+00> : vector<8xf32>
    %10 = vector.multi_reduction <add>, %7, %cst_11 [1] : vector<8x128xf32> to vector<8xf32>
    %11 = vector.shape_cast %10 : vector<8xf32> to vector<8x1xf32>
    %cst_12 = arith.constant 3.125000e-02 : f32
    %12 = vector.broadcast %cst_12 : f32 to vector<8x1xf32>
    %13 = arith.mulf %11, %12 : vector<8x1xf32>
    %14 = vector.broadcast %13 : vector<8x1xf32> to vector<8x128xf32>
    %15 = arith.subf %7, %14 : vector<8x128xf32>
    %16 = tpu.iota {dimensions = array<i32: 1>} : vector<8x128xi32>
    %c32_i32 = arith.constant 32 : i32
    %17 = vector.broadcast %c32_i32 : i32 to vector<8x128xi32>
    %18 = arith.cmpi slt, %16, %17 : vector<8x128xi32>
    %cst_13 = arith.constant 0.000000e+00 : f32
    %19 = vector.broadcast %cst_13 : f32 to vector<8x128xf32>
    %20 = arith.select %18, %15, %19 : vector<8x128xi1>, vector<8x128xf32>
    %21 = arith.mulf %20, %20 : vector<8x128xf32>
    %cst_14 = arith.constant dense<0.000000e+00> : vector<8xf32>
    %22 = vector.multi_reduction <add>, %21, %cst_14 [1] : vector<8x128xf32> to vector<8xf32>
    %23 = vector.shape_cast %22 : vector<8xf32> to vector<8x1xf32>
    %cst_15 = arith.constant 3.125000e-02 : f32
    %24 = vector.broadcast %cst_15 : f32 to vector<8x1xf32>
    %25 = arith.mulf %23, %24 : vector<8x1xf32>
    %cst_16 = arith.constant 9.99999996E-13 : f32
    %26 = vector.broadcast %cst_16 : f32 to vector<8x1xf32>
    %27 = arith.addf %25, %26 : vector<8x1xf32>
    %28 = math.rsqrt %27 : vector<8x1xf32>
    %29 = vector.broadcast %28 : vector<8x1xf32> to vector<8x128xf32>
    %30 = arith.mulf %20, %29 : vector<8x128xf32>
    %31 = vector.broadcast %8 : vector<1x128xf32> to vector<8x128xf32>
    %32 = arith.mulf %30, %31 : vector<8x128xf32>
    %33 = vector.broadcast %9 : vector<1x128xf32> to vector<8x128xf32>
    %34 = arith.addf %32, %33 : vector<8x128xf32>
    %c0_17 = arith.constant 0 : index
    %c0_18 = arith.constant 0 : index
    %35 = vector.load %arg7[%c0_17, %c0_18] : memref<8x128xf32, #tpu.memory_space<vmem>>, vector<8x128xf32>
    tpu.vector_store %arg7[%c0_17, %c0_18], %34 {strides = array<i32>} : memref<8x128xf32, #tpu.memory_space<vmem>>, vector<8x128xf32>,
    return
  }
  func.func @transform_0(%arg0: i32) -> (i32, i32) {
    %c0_i32 = arith.constant 0 : i32
    %c0_i32_0 = arith.constant 0 : i32
    return %arg0, %c0_i32 : i32, i32
  }
  func.func @transform_1(%arg0: i32) -> (i32, i32) {
    %c0_i32 = arith.constant 0 : i32
    %c0_i32_0 = arith.constant 0 : i32
    %c0_i32_1 = arith.constant 0 : i32
    return %c0_i32, %c0_i32_0 : i32, i32
  }
  func.func @transform_2(%arg0: i32) -> (i32, i32) {
    %c0_i32 = arith.constant 0 : i32
    %c0_i32_0 = arith.constant 0 : i32
    %c0_i32_1 = arith.constant 0 : i32
    return %c0_i32, %c0_i32_0 : i32, i32
  }
  func.func @transform_3(%arg0: i32) -> (i32, i32) {
    %c0_i32 = arith.constant 0 : i32
    %c0_i32_0 = arith.constant 0 : i32
    return %arg0, %c0_i32 : i32, i32
  }
  func.func @transform_4(%arg0: i32) -> (i32, i32) {
    %c0_i32 = arith.constant 0 : i32
    %c0_i32_0 = arith.constant 0 : i32
    %c0_i32_1 = arith.constant 0 : i32
    return %c0_i32, %c0_i32_0 : i32, i32
  }
  func.func @transform_5(%arg0: i32) -> (i32, i32) {
    %c0_i32 = arith.constant 0 : i32
    %c0_i32_0 = arith.constant 0 : i32
    %c0_i32_1 = arith.constant 0 : i32
    return %c0_i32, %c0_i32_0 : i32, i32
  }
  func.func @transform_6(%arg0: i32) -> (i32, i32) {
    %c0_i32 = arith.constant 0 : i32
    %c0_i32_0 = arith.constant 0 : i32
    return %arg0, %c0_i32 : i32, i32
  }
}

</mosaic_0001>

<llo_original>
// kernel: tpu_custom_call.1
$region0: #{tpu_custom_call.1}
  #allocation0 [shape = 'u32[]', space=smem, size = 0x4, offset = 0x4, fixed_abs, tag = 'smem constant byte address 0x4 - core index']
  #allocation1 [shape = 'u32[144,128]{1,0:T(1,128)}', space=vmem, size = 0x12000, scoped, tag = 'internal scratch']
  %s0 = inlined_call_operand.hbm [shape: f32[16,128], index: 0, kind: input, shape index: {}]
  %s1 = inlined_call_operand.hbm [shape: f32[128,128], index: 1, kind: input, shape index: {}]
  %s2 = inlined_call_operand.vmem [shape: f32[1,128], index: 2, kind: input, shape index: {}]
  %s3 = inlined_call_operand.hbm [shape: f32[16,128], index: 3, kind: input, shape index: {}]
  %s4 = inlined_call_operand.vmem [shape: f32[1,128], index: 4, kind: input, shape index: {}]
  %s5 = inlined_call_operand.vmem [shape: f32[1,128], index: 5, kind: input, shape index: {}]
  %s6 = inlined_call_operand.hbm [shape: f32[16,128], index: 6, kind: output, shape index: {}]
  %s7 = sld [smem:[#allocation0]]
  $region69: #{tpu_custom_call.1} parent=0
    _
  %s9 = ssub.s32 1, %s7
  %s10 = scalar_select 0, %s9, %s7
  $region1: #{tpu_custom_call.1} parent=0
    #allocation2 [shape = 'u8[8192]{0}', space=vmem, size = 0x2000, scoped, tag = 'input window, operand 0']
    #allocation3 [shape = 's32[2]{0}', space=sflag, size = 0x8, scoped, tag = 'scoped memory for tpu_custom_call.1']
    #allocation4 [shape = 's32[2]{0}', space=sflag, size = 0x8, scoped, tag = 'scoped memory for tpu_custom_call.1']
    #allocation5 [shape = 'u8[65536]{0}', space=vmem, size = 0x10000, scoped, tag = 'input window, operand 1, single buffered']
    #allocation6 [shape = 's32[1]{0}', space=sflag, size = 0x4, scoped, tag = 'scoped memory for tpu_custom_call.1']
    #allocation7 [shape = 'u8[8192]{0}', space=vmem, size = 0x2000, scoped, tag = 'input window, operand 3']
    #allocation8 [shape = 'u8[8192]{0}', space=vmem, size = 0x2000, scoped, tag = 'output window, operand 0']
    %11 = vsyncpa [#allocation3], 0
    %s12 = scalar_lea.sflag [#allocation3], 1
    %13 = vsyncpa %s12, 0
    %14 = vsyncpa [#allocation6], 0
    %15 = vsyncpa [#allocation4], 0
    %s16 = scalar_lea.sflag [#allocation4], 1
    %17 = vsyncpa %s16, 0
    loop: start=0, step=1, limit=4
    $region2: #{tpu_custom_call.1} parent=1 // loop_pre_header
      _
    $region3: #{tpu_custom_call.1} parent=1 // loop_header
      %s19 = sphi 0, %s23
      %p20 = scmp.ge.s32.totalorder %s19, 4
      %s29 = sphi 0, %s31
      %s32 = sphi 0, %s29
      %s33 = sphi 0, %s32
      %s49 = sphi 0, %s33
      %s53 = sphi 0, %s53
      %s55 = sphi 0, %s53
      %s56 = sphi 0, %s55
      %s70 = sphi 0, %s56
      %s74 = sphi 0, %s74
      %s76 = sphi 0, %s74
      %s77 = sphi 0, %s76
      %s91 = sphi 0, %s77
      %s97 = sphi 0, %s99
      %s100 = sphi 0, %s97
      %s101 = sphi 0, %s100
      %s117 = sphi 0, %s101
      %s121 = sphi 0, %s121
      %s123 = sphi 0, %s121
      %s124 = sphi 0, %s123
      %s138 = sphi 0, %s124
      %s142 = sphi 0, %s142
      %s144 = sphi 0, %s142
      %s145 = sphi 0, %s144
      %s159 = sphi 0, %s145
      %s165 = sphi 0, %s167
      %s168 = sphi 0, %s165
      %s169 = sphi 0, %s168
      %s185 = sphi 0, %s169
    $region4: #{tpu_custom_call.1} parent=1 // loop_header_branch
      %22 = sbr.rel (%p20) target = $region8
    $region5: #{tpu_custom_call.1} parent=1 // loop_body
      %s24 = ssub.s32 %s19, 1
      %s25 = ssub.s32 %s19, 2
      %s26 = sadd.s32 %s19, 1
      %s27 = ssub.s32 %s19, %s26
      %p28 = scmp.eq.s32.totalorder %s27, 0
      %s30 = sadd.s32 %s29, 1
      %s31 = scalar_select %p28, %s29, %s30
      %p34 = pneg %p28
      %p35 = scmp.eq.s32.totalorder %s19, 1
      %p36 = por %p34, %p35
      %p37 = scmp.ne.s32.totalorder %s29, %s32
      %p38 = scmp.eq.s32.totalorder %s19, 0
      %p39 = por %p37, %p38
      %p40 = scmp.ne.s32.totalorder %s29, %s32
      %p41 = scmp.eq.s32.totalorder %s24, 1
      %p42 = por %p40, %p41
      %p43 = scmp.ne.s32.totalorder %s32, %s33
      %p44 = scmp.eq.s32.totalorder %s24, 0
      %p45 = por %p43, %p44
      %p46 = scmp.ne.s32.totalorder %s32, %s33
      %p47 = scmp.eq.s32.totalorder %s25, 1
      %p48 = por %p46, %p47
      %p50 = scmp.ne.s32.totalorder %s33, %s49
      %p51 = scmp.eq.s32.totalorder %s25, 0
      %p52 = por %p50, %p51
      %s54 = sadd.s32 %s53, 1
      %p57 = scmp.eq.s32.totalorder %s19, 1
      %p58 = scmp.ne.s32.totalorder %s53, %s55
      %p59 = scmp.eq.s32.totalorder %s19, 0
      %p60 = por %p58, %p59
      %p61 = scmp.ne.s32.totalorder %s53, %s55
      %p62 = scmp.eq.s32.totalorder %s24, 1
      %p63 = por %p61, %p62
      %p64 = scmp.ne.s32.totalorder %s55, %s56
      %p65 = scmp.eq.s32.totalorder %s24, 0
      %p66 = por %p64, %p65
      %p67 = scmp.ne.s32.totalorder %s55, %s56
      %p68 = scmp.eq.s32.totalorder %s25, 1
      %p69 = por %p67, %p68
      %p71 = scmp.ne.s32.totalorder %s56, %s70
      %p72 = scmp.eq.s32.totalorder %s25, 0
      %p73 = por %p71, %p72
      %s75 = sadd.s32 %s74, 1
      %p78 = scmp.eq.s32.totalorder %s19, 1
      %p79 = scmp.ne.s32.totalorder %s74, %s76
      %p80 = scmp.eq.s32.totalorder %s19, 0
      %p81 = por %p79, %p80
      %p82 = scmp.ne.s32.totalorder %s74, %s76
      %p83 = scmp.eq.s32.totalorder %s24, 1
      %p84 = por %p82, %p83
      %p85 = scmp.ne.s32.totalorder %s76, %s77
      %p86 = scmp.eq.s32.totalorder %s24, 0
      %p87 = por %p85, %p86
      %p88 = scmp.ne.s32.totalorder %s76, %s77
      %p89 = scmp.eq.s32.totalorder %s25, 1
      %p90 = por %p88, %p89
      %p92 = scmp.ne.s32.totalorder %s77, %s91
      %p93 = scmp.eq.s32.totalorder %s25, 0
      %p94 = por %p92, %p93
      %s95 = ssub.s32 %s19, %s26
      %p96 = scmp.eq.s32.totalorder %s95, 0
      %s98 = sadd.s32 %s97, 1
      %s99 = scalar_select %p96, %s97, %s98
      %p102 = pneg %p96
      %p103 = scmp.eq.s32.totalorder %s19, 1
      %p104 = por %p102, %p103
      %p105 = scmp.ne.s32.totalorder %s97, %s100
      %p106 = scmp.eq.s32.totalorder %s19, 0
      %p107 = por %p105, %p106
      %p108 = scmp.ne.s32.totalorder %s97, %s100
      %p109 = scmp.eq.s32.totalorder %s24, 1
      %p110 = por %p108, %p109
      %p111 = scmp.ne.s32.totalorder %s100, %s101
      %p112 = scmp.eq.s32.totalorder %s24, 0
      %p113 = por %p111, %p112
      %p114 = scmp.ne.s32.totalorder %s100, %s101
      %p115 = scmp.eq.s32.totalorder %s25, 1
      %p116 = por %p114, %p115
      %p118 = scmp.ne.s32.totalorder %s101, %s117
      %p119 = scmp.eq.s32.totalorder %s25, 0
      %p120 = por %p118, %p119
      %s122 = sadd.s32 %s121, 1
      %p125 = scmp.eq.s32.totalorder %s19, 1
      %p126 = scmp.ne.s32.totalorder %s121, %s123
      %p127 = scmp.eq.s32.totalorder %s19, 0
      %p128 = por %p126, %p127
      %p129 = scmp.ne.s32.totalorder %s121, %s123
      %p130 = scmp.eq.s32.totalorder %s24, 1
      %p131 = por %p129, %p130
      %p132 = scmp.ne.s32.totalorder %s123, %s124
      %p133 = scmp.eq.s32.totalorder %s24, 0
      %p134 = por %p132, %p133
      %p135 = scmp.ne.s32.totalorder %s123, %s124
      %p136 = scmp.eq.s32.totalorder %s25, 1
      %p137 = por %p135, %p136
      %p139 = scmp.ne.s32.totalorder %s124, %s138
      %p140 = scmp.eq.s32.totalorder %s25, 0
      %p141 = por %p139, %p140
      %s143 = sadd.s32 %s142, 1
      %p146 = scmp.eq.s32.totalorder %s19, 1
      %p147 = scmp.ne.s32.totalorder %s142, %s144
      %p148 = scmp.eq.s32.totalorder %s19, 0
      %p149 = por %p147, %p148
      %p150 = scmp.ne.s32.totalorder %s142, %s144
      %p151 = scmp.eq.s32.totalorder %s24, 1
      %p152 = por %p150, %p151
      %p153 = scmp.ne.s32.totalorder %s144, %s145
      %p154 = scmp.eq.s32.totalorder %s24, 0
      %p155 = por %p153, %p154
      %p156 = scmp.ne.s32.totalorder %s144, %s145
      %p157 = scmp.eq.s32.totalorder %s25, 1
      %p158 = por %p156, %p157
      %p160 = scmp.ne.s32.totalorder %s145, %s159
      %p161 = scmp.eq.s32.totalorder %s25, 0
      %p162 = por %p160, %p161
      %s163 = ssub.s32 %s19, %s26
      %p164 = scmp.eq.s32.totalorder %s163, 0
      %s166 = sadd.s32 %s165, 1
      %s167 = scalar_select %p164, %s165, %s166
      %p170 = pneg %p164
      %p171 = scmp.eq.s32.totalorder %s19, 1
      %p172 = por %p170, %p171
      %p173 = scmp.ne.s32.totalorder %s165, %s168
      %p174 = scmp.eq.s32.totalorder %s19, 0
      %p175 = por %p173, %p174
      %p176 = scmp.ne.s32.totalorder %s165, %s168
      %p177 = scmp.eq.s32.totalorder %s24, 1
      %p178 = por %p176, %p177
      %p179 = scmp.ne.s32.totalorder %s168, %s169
      %p180 = scmp.eq.s32.totalorder %s24, 0
      %p181 = por %p179, %p180
      %p182 = scmp.ne.s32.totalorder %s168, %s169
      %p183 = scmp.eq.s32.totalorder %s25, 1
      %p184 = por %p182, %p183
      %p186 = scmp.ne.s32.totalorder %s169, %s185
      %p187 = scmp.eq.s32.totalorder %s25, 0
      %p188 = por %p186, %p187
      %p189 = scmp.le.s32.totalorder 1, %s19
      %p190 = scmp.lt.s32.totalorder %s19, 3
      %p191 = pnand %p189, %p190
      %p192 = pneg %p191
      // Predicated region
      $region9: #{tpu_custom_call.1} parent=5 // pred_check
        _
      $region10: #{tpu_custom_call.1} parent=5 // pred_check_branch
        %194 = sbr.rel (%p191) target = $region12
      $region11: #{tpu_custom_call.1} parent=5 // pred_region
        %s195 = ssub.s32 %s19, 1
        // Predicated region
        $region13: #{tpu_custom_call.1} parent=11 // pred_check
          %p196 = pneg %p66
        $region14: #{tpu_custom_call.1} parent=11 // pred_check_branch
          %198 = sbr.rel (%p196) target = $region16
        $region15: #{tpu_custom_call.1} parent=11 // pred_region
          %s200 = ssub.s32 2048, 2048
          %201 = vsyncadd [#allocation6], %s200
          %s202 = sshll.u32 [#allocation5], 4
          %s203 = int_to_ptr.vmem [resolvable:$true] %s202
          %208 = dma.hbm_to_vmem [thread:$0]  %s1, 2048, %s203, [#allocation6], 128, 128, 8
        $region16: #{tpu_custom_call.1} parent=11 // pred_fallthru
          _
        // Predicated region
        $region17: #{tpu_custom_call.1} parent=11 // pred_check
          %p209 = pneg %p87
        $region18: #{tpu_custom_call.1} parent=11 // pred_check_branch
          %211 = sbr.rel (%p209) target = $region20
        $region19: #{tpu_custom_call.1} parent=11 // pred_region
          _
        $region20: #{tpu_custom_call.1} parent=11 // pred_fallthru
          _
        // Predicated region
        $region21: #{tpu_custom_call.1} parent=11 // pred_check
          %p212 = pneg %p134
        $region22: #{tpu_custom_call.1} parent=11 // pred_check_branch
          %214 = sbr.rel (%p212) target = $region24
        $region23: #{tpu_custom_call.1} parent=11 // pred_region
          _
        $region24: #{tpu_custom_call.1} parent=11 // pred_fallthru
          _
        // Predicated region
        $region25: #{tpu_custom_call.1} parent=11 // pred_check
          %p215 = pneg %p155
        $region26: #{tpu_custom_call.1} parent=11 // pred_check_branch
          %217 = sbr.rel (%p215) target = $region28
        $region27: #{tpu_custom_call.1} parent=11 // pred_region
          _
        $region28: #{tpu_custom_call.1} parent=11 // pred_fallthru
          _
      $region12: #{tpu_custom_call.1} parent=5 // pred_fallthru
        _
      %p218 = scmp.lt.s32.totalorder %s19, 2
      // Predicated region
      $region29: #{tpu_custom_call.1} parent=5 // pred_check
        %p219 = pneg %p218
      $region30: #{tpu_custom_call.1} parent=5 // pred_check_branch
        %221 = sbr.rel (%p219) target = $region32
      $region31: #{tpu_custom_call.1} parent=5 // pred_region
        // Predicated region
        $region33: #{tpu_custom_call.1} parent=31 // pred_check
          %p222 = pneg %p39
        $region34: #{tpu_custom_call.1} parent=31 // pred_check_branch
          %224 = sbr.rel (%p222) target = $region36
        $region35: #{tpu_custom_call.1} parent=31 // pred_region
          %s225 = sand.u32 %s19, 1
          %s226 = scalar_lea.sflag [#allocation3], %s225
          %s227 = sand.u32 %s29, 1
          %s228 = smul.addr %s227, 8
          %s229 = scalar_lea.vmem [#allocation2], %s228
          %s231 = ssub.s32 128, 128
          %232 = vsyncadd %s226, %s231
          %s233 = smul.addr %s19, 128
          %s234 = scalar_lea.hbm %s0, %s233
          %s236 = sshll.u32 %s229, 4
          %s237 = int_to_ptr.vmem [resolvable:$true] %s236
          %239 = dma.hbm_to_vmem [thread:$0]  %s234, 128, %s237, %s226
        $region36: #{tpu_custom_call.1} parent=31 // pred_fallthru
          _
        // Predicated region
        $region37: #{tpu_custom_call.1} parent=31 // pred_check
          %p240 = pneg %p107
        $region38: #{tpu_custom_call.1} parent=31 // pred_check_branch
          %242 = sbr.rel (%p240) target = $region40
        $region39: #{tpu_custom_call.1} parent=31 // pred_region
          %s243 = sand.u32 %s19, 1
          %s244 = scalar_lea.sflag [#allocation3], %s243
          %s245 = sand.u32 %s97, 1
          %s246 = smul.addr %s245, 8
          %s247 = scalar_lea.vmem [#allocation7], %s246
          %s249 = ssub.s32 128, 128
          %250 = vsyncadd %s244, %s249
          %s251 = smul.addr %s19, 128
          %s252 = scalar_lea.hbm %s3, %s251
          %s254 = sshll.u32 %s247, 4
          %s255 = int_to_ptr.vmem [resolvable:$true] %s254
          %257 = dma.hbm_to_vmem [thread:$0]  %s252, 128, %s255, %s244
        $region40: #{tpu_custom_call.1} parent=31 // pred_fallthru
          _
      $region32: #{tpu_custom_call.1} parent=5 // pred_fallthru
        _
      %p258 = scmp.le.s32.totalorder 1, %s19
      %p259 = scmp.lt.s32.totalorder %s19, 3
      %p260 = pnand %p258, %p259
      %p261 = pneg %p260
      // Predicated region
      $region41: #{tpu_custom_call.1} parent=5 // pred_check
        _
      $region42: #{tpu_custom_call.1} parent=5 // pred_check_branch
        %263 = sbr.rel (%p260) target = $region44
      $region43: #{tpu_custom_call.1} parent=5 // pred_region
        %s264 = ssub.s32 %s19, 1
        %s265 = sand.u32 %s24, 1
        %s266 = scalar_lea.sflag [#allocation3], %s265
        %s267 = sand.u32 %s32, 1
        %s268 = smul.addr %s267, 8
        %s269 = scalar_lea.vmem [#allocation2], %s268
        // Predicated region
        $region45: #{tpu_custom_call.1} parent=43 // pred_check
          %p270 = pneg %p45
        $region46: #{tpu_custom_call.1} parent=43 // pred_check_branch
          %272 = sbr.rel (%p270) target = $region48
        $region47: #{tpu_custom_call.1} parent=43 // pred_region
          %273 = dma.done %s266, 128
        $region48: #{tpu_custom_call.1} parent=43 // pred_fallthru
          _
        // Predicated region
        $region49: #{tpu_custom_call.1} parent=43 // pred_check
          %p274 = pneg %p66
        $region50: #{tpu_custom_call.1} parent=43 // pred_check_branch
          %276 = sbr.rel (%p274) target = $region52
        $region51: #{tpu_custom_call.1} parent=43 // pred_region
          %277 = dma.done [#allocation6], 2048
        $region52: #{tpu_custom_call.1} parent=43 // pred_fallthru
          _
        %s278 = sand.u32 %s24, 1
        %s279 = scalar_lea.sflag [#allocation3], %s278
        %s280 = sand.u32 %s100, 1
        %s281 = smul.addr %s280, 8
        %s282 = scalar_lea.vmem [#allocation7], %s281
        // Predicated region
        $region53: #{tpu_custom_call.1} parent=43 // pred_check
          %p283 = pneg %p113
        $region54: #{tpu_custom_call.1} parent=43 // pred_check_branch
          %285 = sbr.rel (%p283) target = $region56
        $region55: #{tpu_custom_call.1} parent=43 // pred_region
          %286 = dma.done %s279, 128
        $region56: #{tpu_custom_call.1} parent=43 // pred_fallthru
          _
        %s287 = sand.u32 %s24, 1
        %s288 = scalar_lea.sflag [#allocation3], %s287
        %s289 = sand.u32 %s32, 1
        %s290 = smul.addr %s289, 8
        %s291 = scalar_lea.vmem [#allocation2], %s290
        %p292 = pneg %p45
        %p293 = pneg %p42
        %p294 = pneg %p66
        %p295 = pneg %p63
        %p296 = pneg %p87
        %p297 = pneg %p84
        %s298 = sand.u32 %s24, 1
        %s299 = scalar_lea.sflag [#allocation3], %s298
        %s300 = sand.u32 %s100, 1
        %s301 = smul.addr %s300, 8
        %s302 = scalar_lea.vmem [#allocation7], %s301
        %p303 = pneg %p113
        %p304 = pneg %p110
        %p305 = pneg %p134
        %p306 = pneg %p131
        %p307 = pneg %p155
        %p308 = pneg %p152
        %p309 = pneg %p181
        %p310 = pneg %p178
        %s311 = sand.u32 %s168, 1
        %s312 = scalar_lea.sflag [#allocation4], %s311
        %s313 = sand.u32 %s168, 1
        %s314 = smul.addr %s313, 8
        %s315 = scalar_lea.vmem [#allocation8], %s314
        %v316 = vld [vmem:[%s269] sm:$0xff]
        %v317 = vld [vmem:[#allocation5] sm:$0xff]
        %v318 = vld [vmem:[#allocation5 + $0x8] sm:$0xff]
        %v319 = vld [vmem:[#allocation5 + $0x10] sm:$0xff]
        %v320 = vld [vmem:[#allocation5 + $0x18] sm:$0xff]
        %v321 = vld [vmem:[#allocation5 + $0x20] sm:$0xff]
        %v322 = vld [vmem:[#allocation5 + $0x28] sm:$0xff]
        %v323 = vld [vmem:[#allocation5 + $0x30] sm:$0xff]
        %v324 = vld [vmem:[#allocation5 + $0x38] sm:$0xff]
        %v325 = vld [vmem:[#allocation5 + $0x40] sm:$0xff]
        %v326 = vld [vmem:[#allocation5 + $0x48] sm:$0xff]
        %v327 = vld [vmem:[#allocation5 + $0x50] sm:$0xff]
        %v328 = vld [vmem:[#allocation5 + $0x58] sm:$0xff]
        %v329 = vld [vmem:[#allocation5 + $0x60] sm:$0xff]
        %v330 = vld [vmem:[#allocation5 + $0x68] sm:$0xff]
        %v331 = vld [vmem:[#allocation5 + $0x70] sm:$0xff]
        %v332 = vld [vmem:[#allocation5 + $0x78] sm:$0xff]
        %v333 = vld [vmem:[%s2] sm:$0x1]
        %v335 = vlaneseq
        %v336 = vshrl.u32 %v335, 7
        %v337 = vsub.s32 0, %v336
        %v338 = vrot.slane %v333, %v337
        %340 = vmatprep.subr.mxu0 0.0
        %341 = vmatpush1.msra.mxu0 %v317
        %342 = vmatprep.subr.mxu0 0.0
        %343 = vmatpush1.msra.mxu0 %v318
        %344 = vmatprep.subr.mxu0 0.0
        %345 = vmatpush1.msra.mxu0 %v319
        %346 = vmatprep.subr.mxu0 0.0
        %347 = vmatpush1.msra.mxu0 %v320
        %348 = vmatprep.subr.mxu0 0.0
        %349 = vmatpush1.msra.mxu0 %v321
        %350 = vmatprep.subr.mxu0 0.0
        %351 = vmatpush1.msra.mxu0 %v322
        %352 = vmatprep.subr.mxu0 0.0
        %353 = vmatpush1.msra.mxu0 %v323
        %354 = vmatprep.subr.mxu0 0.0
        %355 = vmatpush1.msra.mxu0 %v324
        %356 = vmatprep.subr.mxu0 0.0
        %357 = vmatpush1.msra.mxu0 %v325
        %358 = vmatprep.subr.mxu0 0.0
        %359 = vmatpush1.msra.mxu0 %v326
        %360 = vmatprep.subr.mxu0 0.0
        %361 = vmatpush1.msra.mxu0 %v327
        %362 = vmatprep.subr.mxu0 0.0
        %363 = vmatpush1.msra.mxu0 %v328
        %364 = vmatprep.subr.mxu0 0.0
        %365 = vmatpush1.msra.mxu0 %v329
        %366 = vmatprep.subr.mxu0 0.0
        %367 = vmatpush1.msra.mxu0 %v330
        %368 = vmatprep.subr.mxu0 0.0
        %369 = vmatpush1.msra.mxu0 %v331
        %370 = vmatprep.subr.mxu0 0.0
        %371 = vmatpush1.msra.mxu0 %v332
        %372 = vmatprep.subr.mxu0 0.0
        %373 = vmatpush1.msra.mxu0 0.0
        %374 = vmatprep.subr.mxu0 0.0
        %375 = vmatpush1.msra.mxu0 0.0
        %376 = vmatprep.subr.mxu0 0.0
        %377 = vmatpush1.msra.mxu0 0.0
        %378 = vmatprep.subr.mxu0 0.0
        %379 = vmatpush1.msra.mxu0 0.0
        %380 = vmatprep.subr.mxu0 0.0
        %381 = vmatpush1.msra.mxu0 0.0
        %382 = vmatprep.subr.mxu0 0.0
        %383 = vmatpush1.msra.mxu0 0.0
        %384 = vmatprep.subr.mxu0 0.0
        %385 = vmatpush1.msra.mxu0 0.0
        %386 = vmatprep.subr.mxu0 0.0
        %387 = vmatpush1.msra.mxu0 0.0
        %388 = vmatprep.subr.mxu0 0.0
        %389 = vmatpush1.msra.mxu0 0.0
        %390 = vmatprep.subr.mxu0 0.0
        %391 = vmatpush1.msra.mxu0 0.0
        %392 = vmatprep.subr.mxu0 0.0
        %393 = vmatpush1.msra.mxu0 0.0
        %394 = vmatprep.subr.mxu0 0.0
        %395 = vmatpush1.msra.mxu0 0.0
        %396 = vmatprep.subr.mxu0 0.0
        %397 = vmatpush1.msra.mxu0 0.0
        %398 = vmatprep.subr.mxu0 0.0
        %399 = vmatpush1.msra.mxu0 0.0
        %400 = vmatprep.subr.mxu0 0.0
        %401 = vmatpush1.msra.mxu0 0.0
        %402 = vmatprep.subr.mxu0 0.0
        %403 = vmatpush1.msra.mxu0 0.0
        %404 = vmatprep.mubr.f32.mxu0 0.0
        %405 = vmatmul.mubr.f32.gmra.mrb[0].mxu0 %v316
        %v406 = vpop.f32.mrb[0].mxu0
        %v407 = vadd.f32 %v338, %v406
        %v408 = vpop.f32.mrb[0].mxu0
        %409 = vdwg.mxu0
        %v410 = vld [vmem:[%s282] sm:$0xff]
        %v411 = vadd.f32 %v407, %v410
        %v412 = vld [vmem:[%s4] sm:$0x1]
        %v413 = vld [vmem:[%s5] sm:$0x1]
        %414 = vadd.xlane.f32.xlu0 %v411
        %v415 = vpop.xlane.xlu0 %414
        %v416 = vmul.f32 %v415, 0.03125
        %v417 = vsub.f32 %v411, %v416
        %v418 = vlaneseq
        %v419 = vand.u32 %v418, 127
        %vm420 = vcmp.lt.s32.totalorder %v419, 32
        %v421 = vsel %vm420, %v417, 0.0
        %v422 = vmul.f32 %v421, %v421
        %423 = vadd.xlane.f32.xlu0 %v422
        %v424 = vpop.xlane.xlu0 %423
        %v425 = vmul.f32 %v424, 0.03125
        %v426 = vadd.f32 %v425, 1e-12
        %v427 = vrsqrt.pop %v426
        %v428 = vmul.f32 %v421, %v427
        %v430 = vlaneseq
        %v431 = vshrl.u32 %v430, 7
        %v432 = vsub.s32 0, %v431
        %v433 = vrot.slane %v412, %v432
        %v435 = vmul.f32 %v428, %v433
        %v437 = vlaneseq
        %v438 = vshrl.u32 %v437, 7
        %v439 = vsub.s32 0, %v438
        %v440 = vrot.slane %v413, %v439
        %v442 = vadd.f32 %v435, %v440
        %443 = vst [vmem:[%s315] sm:$0xff] %v442
        %s444 = sand.u32 %s168, 1
        %s445 = scalar_lea.sflag [#allocation4], %s444
        %s446 = sand.u32 %s168, 1
        %s447 = smul.addr %s446, 8
        %s448 = scalar_lea.vmem [#allocation8], %s447
        // Predicated region
        $region57: #{tpu_custom_call.1} parent=43 // pred_check
          %p449 = pneg %p178
        $region58: #{tpu_custom_call.1} parent=43 // pred_check_branch
          %451 = sbr.rel (%p449) target = $region60
        $region59: #{tpu_custom_call.1} parent=43 // pred_region
          %s453 = ssub.s32 128, 128
          %454 = vsyncadd %s445, %s453
          %s455 = smul.addr %s24, 128
          %s456 = scalar_lea.hbm %s6, %s455
          %s458 = sshll.u32 %s448, 4
          %s459 = int_to_ptr.vmem [resolvable:$true] %s458
          %461 = dma.vmem_to_hbm [thread:$0]  %s459, 128, %s456, %s445
        $region60: #{tpu_custom_call.1} parent=43 // pred_fallthru
          _
      $region44: #{tpu_custom_call.1} parent=5 // pred_fallthru
        _
      %p462 = scmp.le.s32.totalorder 2, %s19
      // Predicated region
      $region61: #{tpu_custom_call.1} parent=5 // pred_check
        %p463 = pneg %p462
      $region62: #{tpu_custom_call.1} parent=5 // pred_check_branch
        %465 = sbr.rel (%p463) target = $region64
      $region63: #{tpu_custom_call.1} parent=5 // pred_region
        %s466 = ssub.s32 %s19, 2
        // Predicated region
        $region65: #{tpu_custom_call.1} parent=63 // pred_check
          %p467 = pneg %p184
        $region66: #{tpu_custom_call.1} parent=63 // pred_check_branch
          %469 = sbr.rel (%p467) target = $region68
        $region67: #{tpu_custom_call.1} parent=63 // pred_region
          %s470 = sand.u32 %s169, 1
          %s471 = scalar_lea.sflag [#allocation4], %s470
          %s472 = sand.u32 %s169, 1
          %s473 = smul.addr %s472, 8
          %s474 = scalar_lea.vmem [#allocation8], %s473
          %475 = dma.done %s471, 128
        $region68: #{tpu_custom_call.1} parent=63 // pred_fallthru
          _
      $region64: #{tpu_custom_call.1} parent=5 // pred_fallthru
        _
    $region6: #{tpu_custom_call.1} parent=1 // loop_footer
      %s23 = sadd.s32 1, %s19
    $region7: #{tpu_custom_call.1} parent=1 // loop_footer_branch
      %18 = sbr.rel target = $region3
    $region8: #{tpu_custom_call.1} parent=1 // loop_exit
      _
    %476 = vsyncpa [#allocation3], 1
    %s477 = scalar_lea.sflag [#allocation3], 1
    %478 = vsyncpa %s477, 1
    %479 = vsyncpa [#allocation6], 1
    %480 = vsyncpa [#allocation4], 1
    %s481 = scalar_lea.sflag [#allocation4], 1
    %482 = vsyncpa %s481, 1

</llo_original>
